<compile_context>
chip_gen: v6e
topology: v6e:2x2x1
jax: 0.10.0
libtpu: 0.0.40
codegen_flags: <defaults>
</compile_context>

<pallas_src>
import functools
import math

import jax
import jax.numpy as jnp
from jax import lax
from jax.experimental import pallas as pl
from jax.experimental.pallas import tpu as pltpu


def _label_smoothing_kernel(tgt_ref, x_ref, out_ref, acc_ref, *,
                            padding_idx, confidence, smooth_val,
                            conf_log_conf, smooth_log_smooth):
    i = pl.program_id(1)                      # reduction axis over row tiles

    @pl.when(i == 0)
    def _():
        acc_ref[...] = jnp.zeros_like(acc_ref)

    x = x_ref[...].astype(jnp.float32)        # (tn, V) log-probabilities
    tgt = tgt_ref[...]                        # (tn, 1) int32 class indices
    tn, v = x.shape

    cols = lax.broadcasted_iota(jnp.int32, (tn, v), 1)
    is_tgt = cols == tgt                      # one-hot scatter mask
    td = jnp.where(is_tgt, jnp.float32(confidence), jnp.float32(smooth_val))
    td_log_td = jnp.where(is_tgt, jnp.float32(conf_log_conf),
                          jnp.float32(smooth_log_smooth))
    # zero the padding column and every row whose target is the padding index
    valid = (cols != padding_idx) & (tgt != padding_idx)
    contrib = jnp.where(valid, td_log_td - td * x, jnp.float32(0.0))

    # Fold (tn, V) -> (8, V) with pure vector adds (no per-step XLU scalar reduce).
    partial = contrib[0:8, :]
    for r in range(1, tn // 8):
        partial = partial + contrib[r * 8:(r + 1) * 8, :]
    acc_ref[...] += partial

    @pl.when(i == pl.num_programs(1) - 1)
    def _():
        total = jnp.sum(acc_ref[...])         # single cross-lane reduce per core
        out_ref[...] = total + jnp.zeros(out_ref.shape, jnp.float32)


def label_smoothing_loss(x, target, *, size, padding_idx, smoothing,
                         num_cores=2, vmem_budget_bytes=24 * 1024 * 1024):
    """Pallas implementation of LabelSmoothing.forward(x, target) -> scalar loss."""
    N, V = x.shape
    assert V == size, "x.shape[1] must equal `size`"

    # Stream x in its native float dtype (bf16 halves HBM bytes); upcast in-kernel.
    if x.dtype not in (jnp.dtype(jnp.float32), jnp.dtype(jnp.bfloat16)):
        x = x.astype(jnp.float32)
    itemsize = x.dtype.itemsize
    row_align = 16 if x.dtype == jnp.dtype(jnp.bfloat16) else 8

    # Row tile: largest that keeps the double-buffered x stream under budget
    # (budget chosen so it also fits v7x's 64 MiB physical / 32 MiB scoped VMEM).
    tn = vmem_budget_bytes // (2 * V * itemsize)
    tn = max(row_align, min(512, (tn // row_align) * row_align))
    rows_per_core = -(-N // num_cores)
    rows_per_core = -(-rows_per_core // row_align) * row_align
    tn = min(tn, max(row_align, rows_per_core))

    steps = -(-N // (num_cores * tn))         # inner (reduction) grid extent
    n_pad = num_cores * tn * steps

    target = target.astype(jnp.int32)
    if n_pad != N:
        # Padded rows get target == padding_idx, so they contribute exactly 0.
        # (Only happens for ragged N; costs one copy of x.)
        x = jnp.pad(x, ((0, n_pad - N), (0, 0)))
        target = jnp.pad(target, (0, n_pad - N), constant_values=padding_idx)
    target2d = target.reshape(n_pad, 1)

    confidence = 1.0 - smoothing
    smooth_val = smoothing / (size - 2)
    conf_log_conf = confidence * math.log(confidence) if confidence > 0 else 0.0
    smooth_log_smooth = smooth_val * math.log(smooth_val) if smooth_val > 0 else 0.0

    kernel = functools.partial(
        _label_smoothing_kernel,
        padding_idx=padding_idx, confidence=confidence, smooth_val=smooth_val,
        conf_log_conf=conf_log_conf, smooth_log_smooth=smooth_log_smooth)

    out = pl.pallas_call(
        kernel,
        out_shape=jax.ShapeDtypeStruct((num_cores, 8, 128), jnp.float32),
        grid_spec=pltpu.PrefetchScalarGridSpec(
            num_scalar_prefetch=0,
            grid=(num_cores, steps),
            in_specs=[
                pl.BlockSpec((tn, 1), lambda c, i: (c * steps + i, 0)),  # targets
                pl.BlockSpec((tn, V), lambda c, i: (c * steps + i, 0)),  # log-probs
            ],
            # per-core partial output block (never shared across the parallel axis)
            out_specs=pl.BlockSpec((1, 8, 128), lambda c, i: (c, 0, 0)),
            scratch_shapes=[pltpu.VMEM((8, V), jnp.float32)],
        ),
        compiler_params=pltpu.CompilerParams(
            dimension_semantics=("parallel", "arbitrary"),
            vmem_limit_bytes=40 * 1024 * 1024),
    )(target2d, x)

    # TODO(synk): the module also caches `self.true_dist`; only the scalar loss is returned here.
    return jnp.sum(out[:, 0, 0])


def _reference_loss(x, target, *, size, padding_idx, smoothing):
    """Pure-JAX reference mirroring the PyTorch module."""
    N, V = x.shape
    confidence = 1.0 - smoothing
    smooth_val = smoothing / (size - 2)
    cols = jnp.arange(V)[None, :]
    tgt = target[:, None]
    td = jnp.where(cols == tgt, confidence, smooth_val)
    td = jnp.where(cols == padding_idx, 0.0, td)
    td = jnp.where(tgt == padding_idx, 0.0, td)
    safe = jnp.where(td > 0, td, 1.0)
    return jnp.sum(jnp.where(td > 0, td * (jnp.log(safe) - x.astype(jnp.float32)), 0.0))


if __name__ == "__main__":
    SIZE = 32          # vocab size (x.size(1))
    PADDING_IDX = 0
    SMOOTHING = 0.1
    N = 16             # number of rows (batch*seq flattened)

    key = jax.random.PRNGKey(0)
    k1, k2 = jax.random.split(key)
    logits = jax.random.normal(k1, (N, SIZE), dtype=jnp.float32)
    x = jax.nn.log_softmax(logits, axis=-1)                       # log-probabilities
    target = jax.random.randint(k2, (N,), 0, SIZE, dtype=jnp.int32)
    # make sure at least one row hits the padding-index path
    target = target.at[3].set(PADDING_IDX)

    loss = label_smoothing_loss(
        x, target, size=SIZE, padding_idx=PADDING_IDX, smoothing=SMOOTHING)
    loss = jax.block_until_ready(loss)

    ref = _reference_loss(
        x, target, size=SIZE, padding_idx=PADDING_IDX, smoothing=SMOOTHING)
    assert jnp.allclose(loss, ref, rtol=1e-5, atol=1e-5), (loss, ref)

    print("KERNEL_OK")
</pallas_src>

<mosaic_0001>
module attributes {stable_mosaic.version = 11 : i64} {
  func.func @_label_smoothing_kernel(%arg0: i32, %arg1: i32, %arg2: memref<8x1xi32, #tpu.memory_space<vmem>>, %arg3: memref<8x32xf32, #tpu.memory_space<vmem>>, %arg4: memref<1x8x128xf32, #tpu.memory_space<vmem>>, %arg5: memref<8x32xf32, #tpu.memory_space<vmem>>) attributes {dimension_semantics = [#tpu.dimension_semantics<parallel>, #tpu.dimension_semantics<arbitrary>], iteration_bounds = array<i64: 2, 1>, scalar_prefetch = 0 : i64, scratch_operands = 1 : i64, tpu.core_type = #tpu.core_type<tc>, window_params = [{transform_indices = @transform_0, window_bounds = array<i64: 8, 1>}, {transform_indices = @transform_1, window_bounds = array<i64: 8, 32>}, {transform_indices = @transform_2, window_bounds = array<i64: 1, 8, 128>}]} {
    %c0_i32 = arith.constant 0 : i32
    %0 = arith.cmpi eq, %arg1, %c0_i32 : i32
    %1 = arith.extui %0 : i1 to i32
    %c0_i32_0 = arith.constant 0 : i32
    %2 = arith.cmpi ne, %1, %c0_i32_0 : i32
    scf.if %2 {
      %cst_16 = arith.constant 0.000000e+00 : f32
      %30 = vector.broadcast %cst_16 : f32 to vector<8x32xf32>
      %c0_17 = arith.constant 0 : index
      %c0_18 = arith.constant 0 : index
      %31 = vector.load %arg5[%c0_17, %c0_18] : memref<8x32xf32, #tpu.memory_space<vmem>>, vector<8x32xf32>
      tpu.vector_store %arg5[%c0_17, %c0_18], %30 {strides = array<i32>} : memref<8x32xf32, #tpu.memory_space<vmem>>, vector<8x32xf32>,
    } else {
    }
    %c0 = arith.constant 0 : index
    %c0_1 = arith.constant 0 : index
    %3 = vector.load %arg3[%c0, %c0_1] : memref<8x32xf32, #tpu.memory_space<vmem>>, vector<8x32xf32>
    %c0_2 = arith.constant 0 : index
    %c0_3 = arith.constant 0 : index
    %4 = vector.load %arg2[%c0_2, %c0_3] : memref<8x1xi32, #tpu.memory_space<vmem>>, vector<8x1xi32>
    %5 = tpu.iota {dimensions = array<i32: 1>} : vector<8x32xi32>
    %6 = vector.broadcast %4 : vector<8x1xi32> to vector<8x32xi32>
    %7 = arith.cmpi eq, %5, %6 : vector<8x32xi32>
    %cst = arith.constant 0.899999976 : f32
    %cst_4 = arith.constant 0.00333333341 : f32
    %8 = vector.broadcast %cst : f32 to vector<8x32xf32>
    %9 = vector.broadcast %cst_4 : f32 to vector<8x32xf32>
    %10 = arith.select %7, %8, %9 : vector<8x32xi1>, vector<8x32xf32>
    %cst_5 = arith.constant -0.0948244631 : f32
    %cst_6 = arith.constant -0.0190126076 : f32
    %11 = vector.broadcast %cst_5 : f32 to vector<8x32xf32>
    %12 = vector.broadcast %cst_6 : f32 to vector<8x32xf32>
    %13 = arith.select %7, %11, %12 : vector<8x32xi1>, vector<8x32xf32>
    %c0_i32_7 = arith.constant 0 : i32
    %14 = vector.broadcast %c0_i32_7 : i32 to vector<8x32xi32>
    %15 = arith.cmpi ne, %5, %14 : vector<8x32xi32>
    %c0_i32_8 = arith.constant 0 : i32
    %16 = vector.broadcast %c0_i32_8 : i32 to vector<8x1xi32>
    %17 = arith.cmpi ne, %4, %16 : vector<8x1xi32>
    %18 = vector.broadcast %17 : vector<8x1xi1> to vector<8x32xi1>
    %19 = arith.andi %15, %18 : vector<8x32xi1>
    %20 = arith.mulf %10, %3 : vector<8x32xf32>
    %21 = arith.subf %13, %20 : vector<8x32xf32>
    %cst_9 = arith.constant 0.000000e+00 : f32
    %22 = vector.broadcast %cst_9 : f32 to vector<8x32xf32>
    %23 = arith.select %19, %21, %22 : vector<8x32xi1>, vector<8x32xf32>
    %c0_10 = arith.constant 0 : index
    %c0_11 = arith.constant 0 : index
    %24 = vector.load %arg5[%c0_10, %c0_11] : memref<8x32xf32, #tpu.memory_space<vmem>>, vector<8x32xf32>
    %25 = arith.addf %24, %23 : vector<8x32xf32>
    %c0_12 = arith.constant 0 : index
    %c0_13 = arith.constant 0 : index
    %26 = vector.load %arg5[%c0_12, %c0_13] : memref<8x32xf32, #tpu.memory_space<vmem>>, vector<8x32xf32>
    tpu.vector_store %arg5[%c0_12, %c0_13], %25 {strides = array<i32>} : memref<8x32xf32, #tpu.memory_space<vmem>>, vector<8x32xf32>,
    %c0_i32_14 = arith.constant 0 : i32
    %27 = arith.cmpi eq, %arg1, %c0_i32_14 : i32
    %28 = arith.extui %27 : i1 to i32
    %c0_i32_15 = arith.constant 0 : i32
    %29 = arith.cmpi ne, %28, %c0_i32_15 : i32
    scf.if %29 {
      %c0_16 = arith.constant 0 : index
      %c0_17 = arith.constant 0 : index
      %30 = vector.load %arg5[%c0_16, %c0_17] : memref<8x32xf32, #tpu.memory_space<vmem>>, vector<8x32xf32>
      %31 = vector.shape_cast %30 : vector<8x32xf32> to vector<1x8x32xf32>
      %cst_18 = arith.constant dense<0.000000e+00> : vector<1xf32>
      %32 = vector.multi_reduction <add>, %31, %cst_18 [1, 2] : vector<1x8x32xf32> to vector<1xf32>
      %33 = vector.shape_cast %32 : vector<1xf32> to vector<1x1x1xf32>
      %34 = vector.extract %33[0, 0, 0] : f32 from vector<1x1x1xf32>
      %cst_19 = arith.constant 0.000000e+00 : f32
      %35 = vector.broadcast %cst_19 : f32 to vector<1x8x128xf32>
      %36 = vector.broadcast %34 : f32 to vector<1x8x128xf32>
      %37 = arith.addf %36, %35 : vector<1x8x128xf32>
      %c0_20 = arith.constant 0 : index
      %c0_21 = arith.constant 0 : index
      %c0_22 = arith.constant 0 : index
      %38 = vector.load %arg4[%c0_20, %c0_21, %c0_22] : memref<1x8x128xf32, #tpu.memory_space<vmem>>, vector<1x8x128xf32>
      tpu.vector_store %arg4[%c0_20, %c0_21, %c0_22], %37 {strides = array<i32>} : memref<1x8x128xf32, #tpu.memory_space<vmem>>, vector<1x8x128xf32>,
    } else {
    }
    return
  }
  func.func @transform_0(%arg0: i32, %arg1: i32) -> (i32, i32) {
    %c1_i32 = arith.constant 1 : i32
    %0 = arith.muli %arg0, %c1_i32 : i32
    %1 = arith.addi %0, %arg1 : i32
    %c0_i32 = arith.constant 0 : i32
    %c0_i32_0 = arith.constant 0 : i32
    return %1, %c0_i32 : i32, i32
  }
  func.func @transform_1(%arg0: i32, %arg1: i32) -> (i32, i32) {
    %c1_i32 = arith.constant 1 : i32
    %0 = arith.muli %arg0, %c1_i32 : i32
    %1 = arith.addi %0, %arg1 : i32
    %c0_i32 = arith.constant 0 : i32
    %c0_i32_0 = arith.constant 0 : i32
    return %1, %c0_i32 : i32, i32
  }
  func.func @transform_2(%arg0: i32, %arg1: i32) -> (i32, i32, i32) {
    %c0_i32 = arith.constant 0 : i32
    %c0_i32_0 = arith.constant 0 : i32
    %c0_i32_1 = arith.constant 0 : i32
    return %arg0, %c0_i32, %c0_i32_0 : i32, i32, i32
  }
}

</mosaic_0001>

<llo_original>
// kernel: tpu_custom_call.1
$region0: #{tpu_custom_call.1}
  #allocation0 [shape = 'u32[]', space=smem, size = 0x4, offset = 0x4, fixed_abs, tag = 'smem constant byte address 0x4 - core index']
  #allocation1 [shape = 'u32[144,128]{1,0:T(1,128)}', space=vmem, size = 0x12000, scoped, tag = 'internal scratch']
  #allocation2 [shape = 'f32[8,32]{1,0:T(8,128)}', space=vmem, size = 0x1000, scoped, tag = 'scratch operand']
  %s0 = inlined_call_operand.vmem [shape: s32[16,1], index: 0, kind: input, shape index: {}]
  %s1 = inlined_call_operand.vmem [shape: f32[16,32], index: 1, kind: input, shape index: {}]
  %s2 = inlined_call_operand.hbm [shape: f32[2,8,128], index: 2, kind: output, shape index: {}]
  %s3 = sld [smem:[#allocation0]]
  $region49: #{tpu_custom_call.1} parent=0
    _
  %s5 = ssub.s32 1, %s3
  %s6 = scalar_select 0, %s5, %s3
  $region1: #{tpu_custom_call.1} parent=0
    #allocation3 [shape = 'u8[8192]{0}', space=vmem, size = 0x2000, scoped, tag = 'output window, operand 0']
    #allocation4 [shape = 's32[2]{0}', space=sflag, size = 0x8, scoped, tag = 'scoped memory for tpu_custom_call.1']
    %7 = vsyncpa [#allocation4], 0
    %s8 = scalar_lea.sflag [#allocation4], 1
    %9 = vsyncpa %s8, 0
    loop: start=0, step=1, limit=4
    $region2: #{tpu_custom_call.1} parent=1 // loop_pre_header
      _
    $region3: #{tpu_custom_call.1} parent=1 // loop_header
      %s11 = sphi 0, %s15
      %p12 = scmp.ge.s32.totalorder %s11, 4
      %s18 = sphi 0, %s30
      %s19 = sphi 0, %s26
      %s20 = sphi 0, %s18
      %s21 = sphi 0, %s19
      %s22 = sphi 0, %s20
      %s23 = sphi 0, %s21
      %s35 = sphi 0, %s37
      %s38 = sphi 0, %s35
      %s39 = sphi 0, %s38
      %s55 = sphi 0, %s39
      %s63 = sphi 0, %s65
      %s66 = sphi 0, %s63
      %s67 = sphi 0, %s66
      %s83 = sphi 0, %s67
      %s89 = sphi 0, %s91
      %s92 = sphi 0, %s89
      %s93 = sphi 0, %s92
      %s109 = sphi 0, %s93
    $region4: #{tpu_custom_call.1} parent=1 // loop_header_branch
      %14 = sbr.rel (%p12) target = $region8
    $region5: #{tpu_custom_call.1} parent=1 // loop_body
      %s16 = ssub.s32 %s11, 1
      %s17 = ssub.s32 %s11, 2
      %s24 = sadd.s32 1, %s19
      %p25 = scmp.ge.s32.totalorder %s24, 1
      %s26 = scalar_select %p25, 0, %s24
      %s27 = sadd.s32 1, %s18
      %s28 = scalar_select %p25, %s27, %s18
      %p29 = scmp.ge.s32.totalorder %s28, 2
      %s30 = scalar_select %p29, 0, %s28
      %s31 = sadd.s32 %s18, %s19
      %s32 = sadd.s32 %s30, %s26
      %s33 = ssub.s32 %s31, %s32
      %p34 = scmp.eq.s32.totalorder %s33, 0
      %s36 = sadd.s32 %s35, 1
      %s37 = scalar_select %p34, %s35, %s36
      %p40 = pneg %p34
      %p41 = scmp.eq.s32.totalorder %s11, 1
      %p42 = por %p40, %p41
      %p43 = scmp.ne.s32.totalorder %s35, %s38
      %p44 = scmp.eq.s32.totalorder %s11, 0
      %p45 = por %p43, %p44
      %p46 = scmp.ne.s32.totalorder %s35, %s38
      %p47 = scmp.eq.s32.totalorder %s16, 1
      %p48 = por %p46, %p47
      %p49 = scmp.ne.s32.totalorder %s38, %s39
      %p50 = scmp.eq.s32.totalorder %s16, 0
      %p51 = por %p49, %p50
      %p52 = scmp.ne.s32.totalorder %s38, %s39
      %p53 = scmp.eq.s32.totalorder %s17, 1
      %p54 = por %p52, %p53
      %p56 = scmp.ne.s32.totalorder %s39, %s55
      %p57 = scmp.eq.s32.totalorder %s17, 0
      %p58 = por %p56, %p57
      %s59 = sadd.s32 %s18, %s19
      %s60 = sadd.s32 %s30, %s26
      %s61 = ssub.s32 %s59, %s60
      %p62 = scmp.eq.s32.totalorder %s61, 0
      %s64 = sadd.s32 %s63, 1
      %s65 = scalar_select %p62, %s63, %s64
      %p68 = pneg %p62
      %p69 = scmp.eq.s32.totalorder %s11, 1
      %p70 = por %p68, %p69
      %p71 = scmp.ne.s32.totalorder %s63, %s66
      %p72 = scmp.eq.s32.totalorder %s11, 0
      %p73 = por %p71, %p72
      %p74 = scmp.ne.s32.totalorder %s63, %s66
      %p75 = scmp.eq.s32.totalorder %s16, 1
      %p76 = por %p74, %p75
      %p77 = scmp.ne.s32.totalorder %s66, %s67
      %p78 = scmp.eq.s32.totalorder %s16, 0
      %p79 = por %p77, %p78
      %p80 = scmp.ne.s32.totalorder %s66, %s67
      %p81 = scmp.eq.s32.totalorder %s17, 1
      %p82 = por %p80, %p81
      %p84 = scmp.ne.s32.totalorder %s67, %s83
      %p85 = scmp.eq.s32.totalorder %s17, 0
      %p86 = por %p84, %p85
      %s87 = ssub.s32 %s18, %s30
      %p88 = scmp.eq.s32.totalorder %s87, 0
      %s90 = sadd.s32 %s89, 1
      %s91 = scalar_select %p88, %s89, %s90
      %p94 = pneg %p88
      %p95 = scmp.eq.s32.totalorder %s11, 1
      %p96 = por %p94, %p95
      %p97 = scmp.ne.s32.totalorder %s89, %s92
      %p98 = scmp.eq.s32.totalorder %s11, 0
      %p99 = por %p97, %p98
      %p100 = scmp.ne.s32.totalorder %s89, %s92
      %p101 = scmp.eq.s32.totalorder %s16, 1
      %p102 = por %p100, %p101
      %p103 = scmp.ne.s32.totalorder %s92, %s93
      %p104 = scmp.eq.s32.totalorder %s16, 0
      %p105 = por %p103, %p104
      %p106 = scmp.ne.s32.totalorder %s92, %s93
      %p107 = scmp.eq.s32.totalorder %s17, 1
      %p108 = por %p106, %p107
      %p110 = scmp.ne.s32.totalorder %s93, %s109
      %p111 = scmp.eq.s32.totalorder %s17, 0
      %p112 = por %p110, %p111
      %p113 = scmp.le.s32.totalorder 1, %s11
      %p114 = scmp.lt.s32.totalorder %s11, 3
      %p115 = pnand %p113, %p114
      %p116 = pneg %p115
      // Predicated region
      $region9: #{tpu_custom_call.1} parent=5 // pred_check
        _
      $region10: #{tpu_custom_call.1} parent=5 // pred_check_branch
        %118 = sbr.rel (%p115) target = $region12
      $region11: #{tpu_custom_call.1} parent=5 // pred_region
        %s119 = ssub.s32 %s11, 1
      $region12: #{tpu_custom_call.1} parent=5 // pred_fallthru
        _
      %p120 = scmp.lt.s32.totalorder %s11, 2
      // Predicated region
      $region13: #{tpu_custom_call.1} parent=5 // pred_check
        %p121 = pneg %p120
      $region14: #{tpu_custom_call.1} parent=5 // pred_check_branch
        %123 = sbr.rel (%p121) target = $region16
      $region15: #{tpu_custom_call.1} parent=5 // pred_region
        // Predicated region
        $region17: #{tpu_custom_call.1} parent=15 // pred_check
          %p124 = pneg %p45
        $region18: #{tpu_custom_call.1} parent=15 // pred_check_branch
          %126 = sbr.rel (%p124) target = $region20
        $region19: #{tpu_custom_call.1} parent=15 // pred_region
          %s127 = sadd.s32 %s18, %s19
          %p128 = scmp.lt.s32.totalorder %s127, 1
          %s129 = scalar_select %p128, %s127, 1
          %s130 = smul.addr %s129, 8
          %s131 = scalar_lea.vmem %s0, %s130
          %s132 = sadd.s32 %s18, %s19
        $region20: #{tpu_custom_call.1} parent=15 // pred_fallthru
          _
        // Predicated region
        $region21: #{tpu_custom_call.1} parent=15 // pred_check
          %p133 = pneg %p73
        $region22: #{tpu_custom_call.1} parent=15 // pred_check_branch
          %135 = sbr.rel (%p133) target = $region24
        $region23: #{tpu_custom_call.1} parent=15 // pred_region
          %s136 = sadd.s32 %s18, %s19
          %p137 = scmp.lt.s32.totalorder %s136, 1
          %s138 = scalar_select %p137, %s136, 1
          %s139 = smul.addr %s138, 8
          %s140 = scalar_lea.vmem %s1, %s139
          %s141 = sadd.s32 %s18, %s19
        $region24: #{tpu_custom_call.1} parent=15 // pred_fallthru
          _
      $region16: #{tpu_custom_call.1} parent=5 // pred_fallthru
        _
      %p142 = scmp.le.s32.totalorder 1, %s11
      %p143 = scmp.lt.s32.totalorder %s11, 3
      %p144 = pnand %p142, %p143
      %p145 = pneg %p144
      // Predicated region
      $region25: #{tpu_custom_call.1} parent=5 // pred_check
        _
      $region26: #{tpu_custom_call.1} parent=5 // pred_check_branch
        %147 = sbr.rel (%p144) target = $region28
      $region27: #{tpu_custom_call.1} parent=5 // pred_region
        %s148 = ssub.s32 %s11, 1
        %s149 = sadd.s32 %s20, %s21
        %p150 = scmp.lt.s32.totalorder %s149, 1
        %s151 = scalar_select %p150, %s149, 1
        %s152 = smul.addr %s151, 8
        %s153 = scalar_lea.vmem %s0, %s152
        %p154 = pneg %p51
        %p155 = pneg %p48
        %s156 = sadd.s32 %s20, %s21
        %p157 = scmp.lt.s32.totalorder %s156, 1
        %s158 = scalar_select %p157, %s156, 1
        %s159 = smul.addr %s158, 8
        %s160 = scalar_lea.vmem %s1, %s159
        %p161 = pneg %p79
        %p162 = pneg %p76
        %p163 = pneg %p105
        %p164 = pneg %p102
        %s165 = sand.u32 %s92, 1
        %s166 = scalar_lea.sflag [#allocation4], %s165
        %s167 = sand.u32 %s92, 1
        %s168 = smul.addr %s167, 8
        %s169 = scalar_lea.vmem [#allocation3], %s168
        %s170 = sadd.s32 %s20, %s21
        %p171 = scmp.lt.s32.totalorder %s170, 1
        %s172 = scalar_select %p171, %s170, 1
        %s173 = smul.addr %s172, 8
        %s174 = scalar_lea.vmem %s0, %s173
        %s175 = sadd.s32 %s20, %s21
        %s176 = sadd.s32 %s20, %s21
        %p177 = scmp.lt.s32.totalorder %s176, 1
        %s178 = scalar_select %p177, %s176, 1
        %s179 = smul.addr %s178, 8
        %s180 = scalar_lea.vmem %s1, %s179
        %s181 = sadd.s32 %s20, %s21
        %p182 = scmp.eq.s32.totalorder %s21, 0
        // Predicated region
        $region29: #{tpu_custom_call.1} parent=27 // pred_check
          %p183 = pneg %p182
        $region30: #{tpu_custom_call.1} parent=27 // pred_check_branch
          %185 = sbr.rel (%p183) target = $region32
        $region31: #{tpu_custom_call.1} parent=27 // pred_region
          %vm186 = vcmask 261120
          %187 = vst.msk [vmem:[#allocation2] sm:$0xff] %vm186, 0.0
        $region32: #{tpu_custom_call.1} parent=27 // pred_fallthru
          _
        %v188 = vld [vmem:[%s180] sm:$0xff]
        %v189 = vld [vmem:[%s174] sm:$0xff]
        %v190 = vlaneseq
        %v191 = vand.u32 %v190, 127
        %192 = vset.pattern.permute.xlu0 0
        %193 = vperm.xlu0 %192, %v189
        %v194 = vpop.permute.xlu0 %193
        %vm195 = vcmp.eq.s32.totalorder %v191, %v194
        %v196 = vsel %vm195, 0.9, 0.0033333334
        %v197 = vsel %vm195, -0.09482446, -0.019012608
        %vm198 = vcmp.ne.s32.totalorder %v191, 0
        %vm199 = vcmp.ne.s32.totalorder %v189, 0
        %v200 = vsel %vm199, 1, 0
        %201 = vset.pattern.permute.xlu0 0
        %202 = vperm.xlu0 %201, %v200
        %v203 = vpop.permute.xlu0 %202
        %vm204 = vcmp.eq.s32.totalorder %v203, 1
        %vm205 = vmand %vm198, %vm204
        %v206 = vmul.f32 %v196, %v188
        %v207 = vsub.f32 %v197, %v206
        %v208 = vsel %vm205, %v207, 0.0
        %v209 = vld [vmem:[#allocation2] sm:$0xff]
        %v210 = vadd.f32 %v209, %v208
        %vm211 = vcmask 261120
        %212 = vst.msk [vmem:[#allocation2] sm:$0xff] %vm211, %v210
        // Predicated region
        $region33: #{tpu_custom_call.1} parent=27 // pred_check
          %p213 = pneg %p182
        $region34: #{tpu_custom_call.1} parent=27 // pred_check_branch
          %215 = sbr.rel (%p213) target = $region36
        $region35: #{tpu_custom_call.1} parent=27 // pred_region
          %v216 = vld [vmem:[#allocation2] sm:$0xff]
          %v217 = vsel %vm211, %v216, 0.0
          %218 = vadd.xlane.f32.xlu0 %v217
          %v219 = vpop.xlane.xlu0 %218
          %v220 = vrot.slane %v219, 4
          %v221 = vadd.f32 %v219, %v220
          %v222 = vrot.slane %v221, 2
          %v223 = vadd.f32 %v221, %v222
          %v224 = vrot.slane %v223, 1
          %v225 = vadd.f32 %v223, %v224
          %s226 = vtos %v225
          %v227 = vstv %s226
          %v228 = vadd.f32 %v227, 0.0
          %229 = vst [vmem:[%s169] sm:$0xff] %v228
        $region36: #{tpu_custom_call.1} parent=27 // pred_fallthru
          _
        %s230 = sand.u32 %s92, 1
        %s231 = scalar_lea.sflag [#allocation4], %s230
        %s232 = sand.u32 %s92, 1
        %s233 = smul.addr %s232, 8
        %s234 = scalar_lea.vmem [#allocation3], %s233
        // Predicated region
        $region37: #{tpu_custom_call.1} parent=27 // pred_check
          %p235 = pneg %p102
        $region38: #{tpu_custom_call.1} parent=27 // pred_check_branch
          %237 = sbr.rel (%p235) target = $region40
        $region39: #{tpu_custom_call.1} parent=27 // pred_region
          %s239 = ssub.s32 128, 128
          %240 = vsyncadd %s231, %s239
          %s241 = smul.addr %s20, 128
          %s242 = scalar_lea.hbm %s2, %s241
          %s244 = sshll.u32 %s234, 4
          %s245 = int_to_ptr.vmem [resolvable:$true] %s244
          %247 = dma.vmem_to_hbm [thread:$0]  %s245, 128, %s242, %s231
        $region40: #{tpu_custom_call.1} parent=27 // pred_fallthru
          _
      $region28: #{tpu_custom_call.1} parent=5 // pred_fallthru
        _
      %p248 = scmp.le.s32.totalorder 2, %s11
      // Predicated region
      $region41: #{tpu_custom_call.1} parent=5 // pred_check
        %p249 = pneg %p248
      $region42: #{tpu_custom_call.1} parent=5 // pred_check_branch
        %251 = sbr.rel (%p249) target = $region44
      $region43: #{tpu_custom_call.1} parent=5 // pred_region
        %s252 = ssub.s32 %s11, 2
        // Predicated region
        $region45: #{tpu_custom_call.1} parent=43 // pred_check
          %p253 = pneg %p108
        $region46: #{tpu_custom_call.1} parent=43 // pred_check_branch
          %255 = sbr.rel (%p253) target = $region48
        $region47: #{tpu_custom_call.1} parent=43 // pred_region
          %s256 = sand.u32 %s93, 1
          %s257 = scalar_lea.sflag [#allocation4], %s256
          %s258 = sand.u32 %s93, 1
          %s259 = smul.addr %s258, 8
          %s260 = scalar_lea.vmem [#allocation3], %s259
          %261 = dma.done %s257, 128
        $region48: #{tpu_custom_call.1} parent=43 // pred_fallthru
          _
      $region44: #{tpu_custom_call.1} parent=5 // pred_fallthru
        _
    $region6: #{tpu_custom_call.1} parent=1 // loop_footer
      %s15 = sadd.s32 1, %s11
    $region7: #{tpu_custom_call.1} parent=1 // loop_footer_branch
      %10 = sbr.rel target = $region3
    $region8: #{tpu_custom_call.1} parent=1 // loop_exit
      _
    %262 = vsyncpa [#allocation4], 1
    %s263 = scalar_lea.sflag [#allocation4], 1
    %264 = vsyncpa %s263, 1

</llo_original>
